<compile_context>
chip_gen: v7x
topology: tpu7x:2x2x1
jax: 0.10.0
libtpu: 0.0.40
codegen_flags: <defaults>
</compile_context>

<pallas_src>
import jax
import jax.numpy as jnp
from jax.experimental import pallas as pl
from jax.experimental.pallas import tpu as pltpu


# --------------------------------------------------------------------------- #
# Hardware detection / tiling plan
# --------------------------------------------------------------------------- #
def _as_int(v):
    try:
        return int(v)
    except Exception:
        return None


def _detect_tpu():
    """Returns (vmem_capacity_bytes, tensorcores_per_chip), conservative fallbacks."""
    vmem = None
    cores = None
    try:
        info = pltpu.get_tpu_info()
        for attr in ("vmem_capacity_bytes", "vmem_bytes", "vmem_size_bytes"):
            v = _as_int(getattr(info, attr, None))
            if v and v > 0:
                vmem = v
                break
        for attr in ("num_cores", "core_count", "num_tensorcores",
                     "tensorcores_per_chip"):
            v = _as_int(getattr(info, attr, None))
            if v and 1 <= v <= 16:
                cores = v
                break
    except Exception:
        pass
    if cores is None:
        cores = 1
        try:
            kind = jax.devices()[0].device_kind.lower()
            # Dual-TensorCore chips (v7x; megacore v4/v5p).  Single-TC
            # inference chips (v5e / v6e) keep cores = 1: splitting the batch
            # there would just double grid steps for no parallelism.
            if ("v7" in kind) or ("v5p" in kind) or ("v4" in kind):
                cores = 2
        except Exception:
            pass
    if vmem is None:
        vmem = 64 * 1024 * 1024  # v7x per-core VMEM: safe lower bound everywhere
    return vmem, cores


def _choose_chunks(B, T, EO, gt_itemsize, whf_itemsize, vmem_bytes, n_cores,
                   max_t_chunk):
    """Pick (b_chunk, t_chunk, vmem_limit_bytes) from the VMEM budget."""
    # Batch split only on dual-TensorCore chips (b_chunk is a leading block dim,
    # so it carries no (8,128) constraint).
    b_chunk = B // 2 if (n_cores >= 2 and B % 2 == 0 and B >= 2) else B

    out_itemsize = 4
    budget = int(0.70 * vmem_bytes)
    # whf + h0 blocks are double-buffered by the pipeline; h scratch is single.
    fixed = 2 * EO * EO * whf_itemsize + 3 * b_chunk * EO * 4
    per_t = 2 * b_chunk * EO * (gt_itemsize + out_itemsize)  # gt + out, 2 buffers

    t_pad_min = ((T + 7) // 8) * 8
    t_max = (budget - fixed) // per_t if budget > fixed else 8
    t_max = max(8, min(int(t_max), int(max_t_chunk), t_pad_min))
    t_max = max(8, (t_max // 8) * 8)
    # Balance chunks so an awkward T does not leave a nearly empty last chunk.
    n_chunks = max(1, -(-t_pad_min // t_max))
    t_chunk = ((-(-t_pad_min // n_chunks) + 7) // 8) * 8

    usage = fixed + per_t * t_chunk
    vmem_limit = int(min(max(usage + (8 << 20), 32 << 20), 112 << 20))
    return b_chunk, int(t_chunk), vmem_limit


# --------------------------------------------------------------------------- #
# Kernel
# --------------------------------------------------------------------------- #
def _make_mgru_kernel(t_chunk, unroll):
    def kernel(gt_ref, h0_ref, whf_ref, out_ref, h_sc):
        # gt_ref : (b_chunk, t_chunk, EO)  precomputed tanh(x_t @ wxh), f32
        # h0_ref : (b_chunk, 1, EO)        initial hidden state
        # whf_ref: (EO, EO)                forget-gate weights (f32 or bf16)
        # out_ref: (b_chunk, t_chunk, EO)  hidden states, batch-major, f32
        # h_sc   : (b_chunk, EO) f32       hidden state carried across chunks
        chunk = pl.program_id(1)

        @pl.when(chunk == 0)
        def _():
            h_sc[...] = h0_ref[...].reshape(h_sc.shape).astype(jnp.float32)

        whf = whf_ref[...]                       # hoisted out of the time loop

        def step(t, h_prev):
            # Serial critical path: MXU matmul -> EUP sigmoid -> VPU blend.
            ft = jax.nn.sigmoid(
                jnp.dot(h_prev.astype(whf.dtype), whf,
                        preferred_element_type=jnp.float32))
            gt = gt_ref[:, pl.ds(t, 1), :].reshape(h_prev.shape)
            gt = gt.astype(jnp.float32)
            h_new = h_prev + ft * (gt - h_prev)   # == (1-ft)*h + ft*gt
            # Batch-major store of one timestep row; off the h->h chain.
            out_ref[:, pl.ds(t, 1), :] = h_new[:, None, :].astype(out_ref.dtype)
            return h_new

        h_sc[...] = jax.lax.fori_loop(0, t_chunk, step, h_sc[...],
                                      unroll=unroll)

    return kernel


# --------------------------------------------------------------------------- #
# Wrapper
# --------------------------------------------------------------------------- #
def mgru_forward(x, h0, wxh, whf, *, gate_dtype=jnp.float32, max_t_chunk=1024):
    """x: (B, T, EI), h0: (1, B, EO), wxh: (EI, EO), whf: (EO, EO).

    Returns (outs (B, T, EO), ht1 (1, B, EO)) matching MGRU.forward with the
    default (unmutated) NOT_MUTATED flags.  gate_dtype=jnp.bfloat16 runs the
    gate matmuls with bf16 operands / f32 accumulation (recommended on
    v6e/v7x); sigmoid, blend and all stored activations stay f32.
    """
    B, T, EI = x.shape
    EO = whf.shape[-1]

    x = x.astype(jnp.float32)
    wxh = wxh.astype(jnp.float32)
    whf_k = whf.astype(gate_dtype)
    h0_b = h0.reshape(B, 1, EO).astype(jnp.float32)

    # ---- Phase 1 (XLA): gt for ALL timesteps, one big batched MXU matmul ----
    # Batch-major ('bto'): no transpose on either side of the recurrent kernel.
    gt_all = jnp.tanh(
        jnp.einsum("bte,eo->bto", x.astype(gate_dtype), wxh.astype(gate_dtype),
                   preferred_element_type=jnp.float32)).astype(jnp.float32)

    # ---- Tiling plan ---------------------------------------------------------
    vmem_bytes, n_cores = _detect_tpu()
    whf_isz = jnp.dtype(gate_dtype).itemsize
    b_chunk, t_chunk, vmem_limit = _choose_chunks(
        B, T, EO, 4, whf_isz, vmem_bytes, n_cores, max_t_chunk)

    T_pad = -(-T // t_chunk) * t_chunk
    if T_pad != T:
        # Awkward / prime T: pad instead of degrading to tiny chunks.
        gt_all = jnp.pad(gt_all, ((0, 0), (0, T_pad - T), (0, 0)))
    n_chunks = T_pad // t_chunk
    grid = (B // b_chunk, n_chunks)

    # Cap the unroll so hoisted gt tiles + the carried h stay well inside the
    # vreg file (spills would land on the serial path).
    per_step_bytes = b_chunk * EO * 4
    unroll = max(1, min(t_chunk, 16, (64 * 1024) // max(per_step_bytes, 1)))

    kernel = _make_mgru_kernel(t_chunk, unroll)

    grid_spec = pltpu.PrefetchScalarGridSpec(
        num_scalar_prefetch=0,
        grid=grid,
        in_specs=[
            pl.BlockSpec((b_chunk, t_chunk, EO), lambda b, c: (b, c, 0)),   # gt
            pl.BlockSpec((b_chunk, 1, EO), lambda b, c: (b, 0, 0)),         # h0
            # TODO(synk): pipeline_mode=pl.Buffered(1) on the loop-invariant
            # whf/h0 blocks would reclaim one buffer each (matters at large EO
            # on v7x's 64 MiB VMEM).
            pl.BlockSpec((EO, EO), lambda b, c: (0, 0)),                    # whf
        ],
        out_specs=pl.BlockSpec((b_chunk, t_chunk, EO), lambda b, c: (b, c, 0)),
        scratch_shapes=[pltpu.VMEM((b_chunk, EO), jnp.float32)],
    )

    cost = pl.CostEstimate(
        flops=2 * B * T_pad * EO * EO + 6 * B * T_pad * EO,
        transcendentals=B * T_pad * EO,
        bytes_accessed=B * T_pad * EO * (4 + 4) + EO * EO * whf_isz + B * EO * 4,
    )

    outs_full = pl.pallas_call(
        kernel,
        out_shape=jax.ShapeDtypeStruct((B, T_pad, EO), jnp.float32),
        grid_spec=grid_spec,
        compiler_params=pltpu.CompilerParams(
            # Batch blocks are independent (sharded across TensorCores on
            # dual-TC chips); the chunked time axis carries the recurrence.
            dimension_semantics=("parallel", "arbitrary"),
            vmem_limit_bytes=vmem_limit,
        ),
        cost_estimate=cost,
    )(gt_all, h0_b, whf_k)

    outs = outs_full if T_pad == T else outs_full[:, :T]
    ht1 = outs_full[:, T - 1][None]              # (1, B, EO) == outs[:, -1]
    return outs, ht1


mgru_forward_jit = jax.jit(mgru_forward,
                           static_argnames=("gate_dtype", "max_t_chunk"))


def mgru_reference(x, h0, wxh, whf):
    """Pure-JAX reference of the unmutated MGRU forward."""
    B, T, _ = x.shape
    ht1 = h0[0]
    outs = []
    for t in range(T):
        ft = jax.nn.sigmoid(ht1 @ whf)
        gt = jnp.tanh(x[:, t] @ wxh)
        h = (1.0 - ft) * ht1 + ft * gt
        outs.append(h)
        ht1 = h
    return jnp.stack(outs, axis=1), ht1[None]


if __name__ == "__main__":
    # Small shapes consistent with the module's forward:
    #   x: (B, T, EI), h0: (1, B, EO)
    B, T, EI, EO = 2, 8, 16, 32

    key = jax.random.PRNGKey(0)
    kx, kh, kwxh, kwhf, kx2 = jax.random.split(key, 5)

    x = jax.random.normal(kx, (B, T, EI), dtype=jnp.float32)
    h0 = jax.random.normal(kh, (1, B, EO), dtype=jnp.float32)

    # Deterministic parameter init (nn.Linear-style uniform(-1/sqrt(fan_in), .)).
    wxh = jax.random.uniform(kwxh, (EI, EO), minval=-1.0 / EI ** 0.5,
                             maxval=1.0 / EI ** 0.5, dtype=jnp.float32)
    whf = jax.random.uniform(kwhf, (EO, EO), minval=-1.0 / EO ** 0.5,
                             maxval=1.0 / EO ** 0.5, dtype=jnp.float32)

    # --- default f32 path -----------------------------------------------------
    outs, ht1 = mgru_forward_jit(x, h0, wxh, whf)
    jax.block_until_ready((outs, ht1))
    outs_ref, ht1_ref = mgru_reference(x, h0, wxh, whf)
    assert outs.shape == (B, T, EO) and ht1.shape == (1, B, EO)
    assert jnp.allclose(outs, outs_ref, atol=1e-5, rtol=1e-5)
    assert jnp.allclose(ht1, ht1_ref, atol=1e-5, rtol=1e-5)

    # --- awkward (prime) T: exercises T-padding + multi-chunk h carry ---------
    T2 = 13
    x2 = jax.random.normal(kx2, (B, T2, EI), dtype=jnp.float32)
    outs2, ht12 = mgru_forward_jit(x2, h0, wxh, whf, max_t_chunk=8)
    jax.block_until_ready((outs2, ht12))
    outs2_ref, ht12_ref = mgru_reference(x2, h0, wxh, whf)
    assert outs2.shape == (B, T2, EO) and ht12.shape == (1, B, EO)
    assert jnp.allclose(outs2, outs2_ref, atol=1e-5, rtol=1e-5)
    assert jnp.allclose(ht12, ht12_ref, atol=1e-5, rtol=1e-5)

    # --- bf16 MXU-operand path (v6e/v7x oriented); loose tolerance because
    # bf16 rounding accumulates across the T-step recurrence -------------------
    outs3, ht13 = mgru_forward_jit(x, h0, wxh, whf, gate_dtype=jnp.bfloat16)
    jax.block_until_ready((outs3, ht13))
    assert jnp.allclose(outs3, outs_ref, atol=1e-1, rtol=1e-1)
    assert jnp.allclose(ht13, ht1_ref, atol=1e-1, rtol=1e-1)

    print("KERNEL_OK")
</pallas_src>

<mosaic_0001>
module attributes {stable_mosaic.version = 11 : i64} {
  func.func @kernel(%arg0: i32, %arg1: i32, %arg2: memref<2x8x32xf32, #tpu.memory_space<vmem>>, %arg3: memref<2x1x32xf32, #tpu.memory_space<vmem>>, %arg4: memref<32x32xf32, #tpu.memory_space<vmem>>, %arg5: memref<2x8x32xf32, #tpu.memory_space<vmem>>, %arg6: memref<2x32xf32, #tpu.memory_space<vmem>>) attributes {dimension_semantics = [#tpu.dimension_semantics<parallel>, #tpu.dimension_semantics<arbitrary>], iteration_bounds = array<i64: 1, 1>, scalar_prefetch = 0 : i64, scratch_operands = 1 : i64, tpu.core_type = #tpu.core_type<tc>, window_params = [{transform_indices = @transform_0, window_bounds = array<i64: 2, 8, 32>}, {transform_indices = @transform_1, window_bounds = array<i64: 2, 1, 32>}, {pipeline_mode = #tpu.pipeline_mode<synchronous>, transform_indices = @transform_2, window_bounds = array<i64: 32, 32>}, {transform_indices = @transform_3, window_bounds = array<i64: 2, 8, 32>}]} {
    %c0_i32 = arith.constant 0 : i32
    %0 = arith.cmpi eq, %arg1, %c0_i32 : i32
    %1 = arith.extui %0 : i1 to i32
    %c0_i32_0 = arith.constant 0 : i32
    %2 = arith.cmpi ne, %1, %c0_i32_0 : i32
    scf.if %2 {
      %c0_54 = arith.constant 0 : index
      %c0_55 = arith.constant 0 : index
      %c0_56 = arith.constant 0 : index
      %126 = vector.load %arg3[%c0_54, %c0_55, %c0_56] : memref<2x1x32xf32, #tpu.memory_space<vmem>>, vector<2x1x32xf32>
      %127 = vector.shape_cast %126 : vector<2x1x32xf32> to vector<2x32xf32>
      %c0_57 = arith.constant 0 : index
      %c0_58 = arith.constant 0 : index
      %128 = vector.load %arg6[%c0_57, %c0_58] : memref<2x32xf32, #tpu.memory_space<vmem>>, vector<2x32xf32>
      tpu.vector_store %arg6[%c0_57, %c0_58], %127 {strides = array<i32>} : memref<2x32xf32, #tpu.memory_space<vmem>>, vector<2x32xf32>,
    } else {
    }
    %c0 = arith.constant 0 : index
    %c0_1 = arith.constant 0 : index
    %3 = vector.load %arg4[%c0, %c0_1] : memref<32x32xf32, #tpu.memory_space<vmem>>, vector<32x32xf32>
    %c0_2 = arith.constant 0 : index
    %c0_3 = arith.constant 0 : index
    %4 = vector.load %arg6[%c0_2, %c0_3] : memref<2x32xf32, #tpu.memory_space<vmem>>, vector<2x32xf32>
    %c0_i32_4 = arith.constant 0 : i32
    %cst = arith.constant dense<0.000000e+00> : vector<2x32xf32>
    %5 = tpu.matmul %4, %3, %cst {dimension_numbers = #tpu.dot_dimension_numbers<[1], [0], [0], [1], [0, 0, 1, 1], [], []>} : vector<2x32xf32>, vector<32x32xf32>, vector<2x32xf32> -> vector<2x32xf32>
    %6 = arith.negf %5 : vector<2x32xf32>
    %7 = math.exp %6 : vector<2x32xf32>
    %cst_5 = arith.constant 1.000000e+00 : f32
    %8 = vector.broadcast %cst_5 : f32 to vector<2x32xf32>
    %9 = arith.addf %8, %7 : vector<2x32xf32>
    %10 = arith.divf %8, %9 : vector<2x32xf32>
    %c0_6 = arith.constant 0 : index
    %11 = arith.index_cast %c0_i32_4 : i32 to index
    %c0_7 = arith.constant 0 : index
    %12 = vector.load %arg2[%c0_6, %11, %c0_7] : memref<2x8x32xf32, #tpu.memory_space<vmem>>, vector<2x1x32xf32>
    %13 = vector.shape_cast %12 : vector<2x1x32xf32> to vector<2x32xf32>
    %14 = arith.subf %13, %4 : vector<2x32xf32>
    %15 = arith.mulf %10, %14 : vector<2x32xf32>
    %16 = arith.addf %4, %15 : vector<2x32xf32>
    %17 = vector.shape_cast %16 : vector<2x32xf32> to vector<2x1x32xf32>
    %c0_8 = arith.constant 0 : index
    %18 = arith.index_cast %c0_i32_4 : i32 to index
    %c0_9 = arith.constant 0 : index
    %19 = vector.load %arg5[%c0_8, %18, %c0_9] : memref<2x8x32xf32, #tpu.memory_space<vmem>>, vector<2x1x32xf32>
    tpu.vector_store %arg5[%c0_8, %18, %c0_9], %17 {strides = array<i32>} : memref<2x8x32xf32, #tpu.memory_space<vmem>>, vector<2x1x32xf32>,
    %c1_i32 = arith.constant 1 : i32
    %cst_10 = arith.constant dense<0.000000e+00> : vector<2x32xf32>
    %20 = tpu.matmul %16, %3, %cst_10 {dimension_numbers = #tpu.dot_dimension_numbers<[1], [0], [0], [1], [0, 0, 1, 1], [], []>} : vector<2x32xf32>, vector<32x32xf32>, vector<2x32xf32> -> vector<2x32xf32>
    %21 = arith.negf %20 : vector<2x32xf32>
    %22 = math.exp %21 : vector<2x32xf32>
    %cst_11 = arith.constant 1.000000e+00 : f32
    %23 = vector.broadcast %cst_11 : f32 to vector<2x32xf32>
    %24 = arith.addf %23, %22 : vector<2x32xf32>
    %25 = arith.divf %23, %24 : vector<2x32xf32>
    %c0_12 = arith.constant 0 : index
    %26 = arith.index_cast %c1_i32 : i32 to index
    %c0_13 = arith.constant 0 : index
    %27 = vector.load %arg2[%c0_12, %26, %c0_13] : memref<2x8x32xf32, #tpu.memory_space<vmem>>, vector<2x1x32xf32>
    %28 = vector.shape_cast %27 : vector<2x1x32xf32> to vector<2x32xf32>
    %29 = arith.subf %28, %16 : vector<2x32xf32>
    %30 = arith.mulf %25, %29 : vector<2x32xf32>
    %31 = arith.addf %16, %30 : vector<2x32xf32>
    %32 = vector.shape_cast %31 : vector<2x32xf32> to vector<2x1x32xf32>
    %c0_14 = arith.constant 0 : index
    %33 = arith.index_cast %c1_i32 : i32 to index
    %c0_15 = arith.constant 0 : index
    %34 = vector.load %arg5[%c0_14, %33, %c0_15] : memref<2x8x32xf32, #tpu.memory_space<vmem>>, vector<2x1x32xf32>
    tpu.vector_store %arg5[%c0_14, %33, %c0_15], %32 {strides = array<i32>} : memref<2x8x32xf32, #tpu.memory_space<vmem>>, vector<2x1x32xf32>,
    %c2_i32 = arith.constant 2 : i32
    %cst_16 = arith.constant dense<0.000000e+00> : vector<2x32xf32>
    %35 = tpu.matmul %31, %3, %cst_16 {dimension_numbers = #tpu.dot_dimension_numbers<[1], [0], [0], [1], [0, 0, 1, 1], [], []>} : vector<2x32xf32>, vector<32x32xf32>, vector<2x32xf32> -> vector<2x32xf32>
    %36 = arith.negf %35 : vector<2x32xf32>
    %37 = math.exp %36 : vector<2x32xf32>
    %cst_17 = arith.constant 1.000000e+00 : f32
    %38 = vector.broadcast %cst_17 : f32 to vector<2x32xf32>
    %39 = arith.addf %38, %37 : vector<2x32xf32>
    %40 = arith.divf %38, %39 : vector<2x32xf32>
    %c0_18 = arith.constant 0 : index
    %41 = arith.index_cast %c2_i32 : i32 to index
    %c0_19 = arith.constant 0 : index
    %42 = vector.load %arg2[%c0_18, %41, %c0_19] : memref<2x8x32xf32, #tpu.memory_space<vmem>>, vector<2x1x32xf32>
    %43 = vector.shape_cast %42 : vector<2x1x32xf32> to vector<2x32xf32>
    %44 = arith.subf %43, %31 : vector<2x32xf32>
    %45 = arith.mulf %40, %44 : vector<2x32xf32>
    %46 = arith.addf %31, %45 : vector<2x32xf32>
    %47 = vector.shape_cast %46 : vector<2x32xf32> to vector<2x1x32xf32>
    %c0_20 = arith.constant 0 : index
    %48 = arith.index_cast %c2_i32 : i32 to index
    %c0_21 = arith.constant 0 : index
    %49 = vector.load %arg5[%c0_20, %48, %c0_21] : memref<2x8x32xf32, #tpu.memory_space<vmem>>, vector<2x1x32xf32>
    tpu.vector_store %arg5[%c0_20, %48, %c0_21], %47 {strides = array<i32>} : memref<2x8x32xf32, #tpu.memory_space<vmem>>, vector<2x1x32xf32>,
    %c3_i32 = arith.constant 3 : i32
    %cst_22 = arith.constant dense<0.000000e+00> : vector<2x32xf32>
    %50 = tpu.matmul %46, %3, %cst_22 {dimension_numbers = #tpu.dot_dimension_numbers<[1], [0], [0], [1], [0, 0, 1, 1], [], []>} : vector<2x32xf32>, vector<32x32xf32>, vector<2x32xf32> -> vector<2x32xf32>
    %51 = arith.negf %50 : vector<2x32xf32>
    %52 = math.exp %51 : vector<2x32xf32>
    %cst_23 = arith.constant 1.000000e+00 : f32
    %53 = vector.broadcast %cst_23 : f32 to vector<2x32xf32>
    %54 = arith.addf %53, %52 : vector<2x32xf32>
    %55 = arith.divf %53, %54 : vector<2x32xf32>
    %c0_24 = arith.constant 0 : index
    %56 = arith.index_cast %c3_i32 : i32 to index
    %c0_25 = arith.constant 0 : index
    %57 = vector.load %arg2[%c0_24, %56, %c0_25] : memref<2x8x32xf32, #tpu.memory_space<vmem>>, vector<2x1x32xf32>
    %58 = vector.shape_cast %57 : vector<2x1x32xf32> to vector<2x32xf32>
    %59 = arith.subf %58, %46 : vector<2x32xf32>
    %60 = arith.mulf %55, %59 : vector<2x32xf32>
    %61 = arith.addf %46, %60 : vector<2x32xf32>
    %62 = vector.shape_cast %61 : vector<2x32xf32> to vector<2x1x32xf32>
    %c0_26 = arith.constant 0 : index
    %63 = arith.index_cast %c3_i32 : i32 to index
    %c0_27 = arith.constant 0 : index
    %64 = vector.load %arg5[%c0_26, %63, %c0_27] : memref<2x8x32xf32, #tpu.memory_space<vmem>>, vector<2x1x32xf32>
    tpu.vector_store %arg5[%c0_26, %63, %c0_27], %62 {strides = array<i32>} : memref<2x8x32xf32, #tpu.memory_space<vmem>>, vector<2x1x32xf32>,
    %c4_i32 = arith.constant 4 : i32
    %cst_28 = arith.constant dense<0.000000e+00> : vector<2x32xf32>
    %65 = tpu.matmul %61, %3, %cst_28 {dimension_numbers = #tpu.dot_dimension_numbers<[1], [0], [0], [1], [0, 0, 1, 1], [], []>} : vector<2x32xf32>, vector<32x32xf32>, vector<2x32xf32> -> vector<2x32xf32>
    %66 = arith.negf %65 : vector<2x32xf32>
    %67 = math.exp %66 : vector<2x32xf32>
    %cst_29 = arith.constant 1.000000e+00 : f32
    %68 = vector.broadcast %cst_29 : f32 to vector<2x32xf32>
    %69 = arith.addf %68, %67 : vector<2x32xf32>
    %70 = arith.divf %68, %69 : vector<2x32xf32>
    %c0_30 = arith.constant 0 : index
    %71 = arith.index_cast %c4_i32 : i32 to index
    %c0_31 = arith.constant 0 : index
    %72 = vector.load %arg2[%c0_30, %71, %c0_31] : memref<2x8x32xf32, #tpu.memory_space<vmem>>, vector<2x1x32xf32>
    %73 = vector.shape_cast %72 : vector<2x1x32xf32> to vector<2x32xf32>
    %74 = arith.subf %73, %61 : vector<2x32xf32>
    %75 = arith.mulf %70, %74 : vector<2x32xf32>
    %76 = arith.addf %61, %75 : vector<2x32xf32>
    %77 = vector.shape_cast %76 : vector<2x32xf32> to vector<2x1x32xf32>
    %c0_32 = arith.constant 0 : index
    %78 = arith.index_cast %c4_i32 : i32 to index
    %c0_33 = arith.constant 0 : index
    %79 = vector.load %arg5[%c0_32, %78, %c0_33] : memref<2x8x32xf32, #tpu.memory_space<vmem>>, vector<2x1x32xf32>
    tpu.vector_store %arg5[%c0_32, %78, %c0_33], %77 {strides = array<i32>} : memref<2x8x32xf32, #tpu.memory_space<vmem>>, vector<2x1x32xf32>,
    %c5_i32 = arith.constant 5 : i32
    %cst_34 = arith.constant dense<0.000000e+00> : vector<2x32xf32>
    %80 = tpu.matmul %76, %3, %cst_34 {dimension_numbers = #tpu.dot_dimension_numbers<[1], [0], [0], [1], [0, 0, 1, 1], [], []>} : vector<2x32xf32>, vector<32x32xf32>, vector<2x32xf32> -> vector<2x32xf32>
    %81 = arith.negf %80 : vector<2x32xf32>
    %82 = math.exp %81 : vector<2x32xf32>
    %cst_35 = arith.constant 1.000000e+00 : f32
    %83 = vector.broadcast %cst_35 : f32 to vector<2x32xf32>
    %84 = arith.addf %83, %82 : vector<2x32xf32>
    %85 = arith.divf %83, %84 : vector<2x32xf32>
    %c0_36 = arith.constant 0 : index
    %86 = arith.index_cast %c5_i32 : i32 to index
    %c0_37 = arith.constant 0 : index
    %87 = vector.load %arg2[%c0_36, %86, %c0_37] : memref<2x8x32xf32, #tpu.memory_space<vmem>>, vector<2x1x32xf32>
    %88 = vector.shape_cast %87 : vector<2x1x32xf32> to vector<2x32xf32>
    %89 = arith.subf %88, %76 : vector<2x32xf32>
    %90 = arith.mulf %85, %89 : vector<2x32xf32>
    %91 = arith.addf %76, %90 : vector<2x32xf32>
    %92 = vector.shape_cast %91 : vector<2x32xf32> to vector<2x1x32xf32>
    %c0_38 = arith.constant 0 : index
    %93 = arith.index_cast %c5_i32 : i32 to index
    %c0_39 = arith.constant 0 : index
    %94 = vector.load %arg5[%c0_38, %93, %c0_39] : memref<2x8x32xf32, #tpu.memory_space<vmem>>, vector<2x1x32xf32>
    tpu.vector_store %arg5[%c0_38, %93, %c0_39], %92 {strides = array<i32>} : memref<2x8x32xf32, #tpu.memory_space<vmem>>, vector<2x1x32xf32>,
    %c6_i32 = arith.constant 6 : i32
    %cst_40 = arith.constant dense<0.000000e+00> : vector<2x32xf32>
    %95 = tpu.matmul %91, %3, %cst_40 {dimension_numbers = #tpu.dot_dimension_numbers<[1], [0], [0], [1], [0, 0, 1, 1], [], []>} : vector<2x32xf32>, vector<32x32xf32>, vector<2x32xf32> -> vector<2x32xf32>
    %96 = arith.negf %95 : vector<2x32xf32>
    %97 = math.exp %96 : vector<2x32xf32>
    %cst_41 = arith.constant 1.000000e+00 : f32
    %98 = vector.broadcast %cst_41 : f32 to vector<2x32xf32>
    %99 = arith.addf %98, %97 : vector<2x32xf32>
    %100 = arith.divf %98, %99 : vector<2x32xf32>
    %c0_42 = arith.constant 0 : index
    %101 = arith.index_cast %c6_i32 : i32 to index
    %c0_43 = arith.constant 0 : index
    %102 = vector.load %arg2[%c0_42, %101, %c0_43] : memref<2x8x32xf32, #tpu.memory_space<vmem>>, vector<2x1x32xf32>
    %103 = vector.shape_cast %102 : vector<2x1x32xf32> to vector<2x32xf32>
    %104 = arith.subf %103, %91 : vector<2x32xf32>
    %105 = arith.mulf %100, %104 : vector<2x32xf32>
    %106 = arith.addf %91, %105 : vector<2x32xf32>
    %107 = vector.shape_cast %106 : vector<2x32xf32> to vector<2x1x32xf32>
    %c0_44 = arith.constant 0 : index
    %108 = arith.index_cast %c6_i32 : i32 to index
    %c0_45 = arith.constant 0 : index
    %109 = vector.load %arg5[%c0_44, %108, %c0_45] : memref<2x8x32xf32, #tpu.memory_space<vmem>>, vector<2x1x32xf32>
    tpu.vector_store %arg5[%c0_44, %108, %c0_45], %107 {strides = array<i32>} : memref<2x8x32xf32, #tpu.memory_space<vmem>>, vector<2x1x32xf32>,
    %c7_i32 = arith.constant 7 : i32
    %cst_46 = arith.constant dense<0.000000e+00> : vector<2x32xf32>
    %110 = tpu.matmul %106, %3, %cst_46 {dimension_numbers = #tpu.dot_dimension_numbers<[1], [0], [0], [1], [0, 0, 1, 1], [], []>} : vector<2x32xf32>, vector<32x32xf32>, vector<2x32xf32> -> vector<2x32xf32>
    %111 = arith.negf %110 : vector<2x32xf32>
    %112 = math.exp %111 : vector<2x32xf32>
    %cst_47 = arith.constant 1.000000e+00 : f32
    %113 = vector.broadcast %cst_47 : f32 to vector<2x32xf32>
    %114 = arith.addf %113, %112 : vector<2x32xf32>
    %115 = arith.divf %113, %114 : vector<2x32xf32>
    %c0_48 = arith.constant 0 : index
    %116 = arith.index_cast %c7_i32 : i32 to index
    %c0_49 = arith.constant 0 : index
    %117 = vector.load %arg2[%c0_48, %116, %c0_49] : memref<2x8x32xf32, #tpu.memory_space<vmem>>, vector<2x1x32xf32>
    %118 = vector.shape_cast %117 : vector<2x1x32xf32> to vector<2x32xf32>
    %119 = arith.subf %118, %106 : vector<2x32xf32>
    %120 = arith.mulf %115, %119 : vector<2x32xf32>
    %121 = arith.addf %106, %120 : vector<2x32xf32>
    %122 = vector.shape_cast %121 : vector<2x32xf32> to vector<2x1x32xf32>
    %c0_50 = arith.constant 0 : index
    %123 = arith.index_cast %c7_i32 : i32 to index
    %c0_51 = arith.constant 0 : index
    %124 = vector.load %arg5[%c0_50, %123, %c0_51] : memref<2x8x32xf32, #tpu.memory_space<vmem>>, vector<2x1x32xf32>
    tpu.vector_store %arg5[%c0_50, %123, %c0_51], %122 {strides = array<i32>} : memref<2x8x32xf32, #tpu.memory_space<vmem>>, vector<2x1x32xf32>,
    %c8_i32 = arith.constant 8 : i32
    %c0_52 = arith.constant 0 : index
    %c0_53 = arith.constant 0 : index
    %125 = vector.load %arg6[%c0_52, %c0_53] : memref<2x32xf32, #tpu.memory_space<vmem>>, vector<2x32xf32>
    tpu.vector_store %arg6[%c0_52, %c0_53], %121 {strides = array<i32>} : memref<2x32xf32, #tpu.memory_space<vmem>>, vector<2x32xf32>,
    return
  }
  func.func @transform_0(%arg0: i32, %arg1: i32) -> (i32, i32, i32) {
    %c0_i32 = arith.constant 0 : i32
    %c0_i32_0 = arith.constant 0 : i32
    return %arg0, %arg1, %c0_i32 : i32, i32, i32
  }
  func.func @transform_1(%arg0: i32, %arg1: i32) -> (i32, i32, i32) {
    %c0_i32 = arith.constant 0 : i32
    %c0_i32_0 = arith.constant 0 : i32
    %c0_i32_1 = arith.constant 0 : i32
    return %arg0, %c0_i32, %c0_i32_0 : i32, i32, i32
  }
  func.func @transform_2(%arg0: i32, %arg1: i32) -> (i32, i32) {
    %c0_i32 = arith.constant 0 : i32
    %c0_i32_0 = arith.constant 0 : i32
    %c0_i32_1 = arith.constant 0 : i32
    return %c0_i32, %c0_i32_0 : i32, i32
  }
  func.func @transform_3(%arg0: i32, %arg1: i32) -> (i32, i32, i32) {
    %c0_i32 = arith.constant 0 : i32
    %c0_i32_0 = arith.constant 0 : i32
    return %arg0, %arg1, %c0_i32 : i32, i32, i32
  }
}

</mosaic_0001>

<llo_original>
// kernel: mgru_forward.1
$region0: #{mgru_forward.1}
  #allocation0 [shape = 'u32[]', space=smem, size = 0x4, offset = 0x4, fixed_abs, tag = 'smem constant byte address 0x4 - core index']
  #allocation1 [shape = 'u32[144,128]{1,0:T(1,128)}', space=vmem, size = 0x12000, scoped, tag = 'internal scratch']
  #allocation2 [shape = 'f32[2,32]{1,0:T(2,128)}', space=vmem, size = 0x400, scoped, tag = 'scratch operand']
  %s0 = inlined_call_operand.vmem [shape: f32[2,8,32], index: 0, kind: input, shape index: {}]
  %s1 = inlined_call_operand.vmem [shape: f32[2,1,32], index: 1, kind: input, shape index: {}]
  %s2 = inlined_call_operand.vmem [shape: f32[32,32], index: 2, kind: input, shape index: {}]
  %s3 = inlined_call_operand.vmem [shape: f32[2,8,32], index: 3, kind: output, shape index: {}]
  %s4 = sld [smem:[#allocation0]]
  $region26: #{mgru_forward.1} parent=0
    _
  %s6 = ssub.s32 1, %s4
  %s7 = scalar_select 0, %s6, %s4
  // Predicated region
  $region2: #{mgru_forward.1} parent=0 // pred_check
    _
  $region3: #{mgru_forward.1} parent=0 // pred_check_branch
    %9 = sbr.rel (0) target = $region5
  $region4: #{mgru_forward.1} parent=0 // pred_region
    _
  $region5: #{mgru_forward.1} parent=0 // pred_fallthru
    _
  // Predicated region
  $region6: #{mgru_forward.1} parent=0 // pred_check
    _
  $region7: #{mgru_forward.1} parent=0 // pred_check_branch
    %11 = sbr.rel (0) target = $region9
  $region8: #{mgru_forward.1} parent=0 // pred_region
    _
  $region9: #{mgru_forward.1} parent=0 // pred_fallthru
    _
  // Predicated region
  $region10: #{mgru_forward.1} parent=0 // pred_check
    _
  $region11: #{mgru_forward.1} parent=0 // pred_check_branch
    %13 = sbr.rel (0) target = $region13
  $region12: #{mgru_forward.1} parent=0 // pred_region
    _
  $region13: #{mgru_forward.1} parent=0 // pred_fallthru
    _
  %p14 = scmp.eq.s32.totalorder 0, 0
  // Predicated region
  $region14: #{mgru_forward.1} parent=0 // pred_check
    %p15 = pneg %p14
  $region15: #{mgru_forward.1} parent=0 // pred_check_branch
    %17 = sbr.rel (%p15) target = $region17
  $region16: #{mgru_forward.1} parent=0 // pred_region
    %v18 = vld [vmem:[%s1] sm:$0x1]
    %v19 = vld [vmem:[%s1 + $0x1] sm:$0x1]
    %v22 = vcombine.low %v18, %v19
    %v24 = vunpack.c.l.s4 1966171168
    %v25 = vunpack.c.0.s8 %v24
    %v26 = vlaneseq
    %v27 = vshrl.u32 %v26, 7
    %v28 = vsub.s32 %v25, %v27
    %v29 = vrot.slane %v22, %v28
    %v31 = vunpack.c.l.s4 1966171168
    %v32 = vunpack.c.0.s8 %v31
    %v33 = vlaneseq
    %v34 = vshrl.u32 %v33, 7
    %v35 = vsub.s32 %v32, %v34
    %v36 = vrot.slane %v29, %v35
    %vm38 = vcmask 254976
    %39 = vst.msk [vmem:[#allocation2] sm:$0x3] %vm38, %v36
  $region17: #{mgru_forward.1} parent=0 // pred_fallthru
    _
  %v40 = vld [vmem:[%s2] sm:$0xff]
  %v41 = vld [vmem:[%s2 + $0x8] sm:$0xff]
  %v42 = vld [vmem:[%s2 + $0x10] sm:$0xff]
  %v43 = vld [vmem:[%s2 + $0x18] sm:$0xff]
  %v44 = vld [vmem:[#allocation2] sm:$0x3]
  %vm45 = vcmask 261120
  %v47 = vsel %vm45, %v44, 0
  %49 = vmatprep.subr.mxu0 0.0
  %50 = vmatpush1.msra.mxu0 %v40
  %51 = vmatprep.subr.mxu0 0.0
  %52 = vmatpush1.msra.mxu0 %v41
  %53 = vmatprep.subr.mxu0 0.0
  %54 = vmatpush1.msra.mxu0 %v42
  %55 = vmatprep.subr.mxu0 0.0
  %56 = vmatpush1.msra.mxu0 %v43
  %57 = vmatprep.subr.mxu0 0.0
  %58 = vmatpush1.msra.mxu0 0.0
  %59 = vmatprep.subr.mxu0 0.0
  %60 = vmatpush1.msra.mxu0 0.0
  %61 = vmatprep.subr.mxu0 0.0
  %62 = vmatpush1.msra.mxu0 0.0
  %63 = vmatprep.subr.mxu0 0.0
  %64 = vmatpush1.msra.mxu0 0.0
  %65 = vmatprep.subr.mxu0 0.0
  %66 = vmatpush1.msra.mxu0 0.0
  %67 = vmatprep.subr.mxu0 0.0
  %68 = vmatpush1.msra.mxu0 0.0
  %69 = vmatprep.subr.mxu0 0.0
  %70 = vmatpush1.msra.mxu0 0.0
  %71 = vmatprep.subr.mxu0 0.0
  %72 = vmatpush1.msra.mxu0 0.0
  %73 = vmatprep.subr.mxu0 0.0
  %74 = vmatpush1.msra.mxu0 0.0
  %75 = vmatprep.subr.mxu0 0.0
  %76 = vmatpush1.msra.mxu0 0.0
  %77 = vmatprep.subr.mxu0 0.0
  %78 = vmatpush1.msra.mxu0 0.0
  %79 = vmatprep.subr.mxu0 0.0
  %80 = vmatpush1.msra.mxu0 0.0
  %81 = vmatprep.subr.mxu0 0.0
  %82 = vmatpush1.msra.mxu0 0.0
  %83 = vmatprep.subr.mxu0 0.0
  %84 = vmatpush1.msra.mxu0 0.0
  %85 = vmatprep.subr.mxu0 0.0
  %86 = vmatpush1.msra.mxu0 0.0
  %87 = vmatprep.subr.mxu0 0.0
  %88 = vmatpush1.msra.mxu0 0.0
  %89 = vmatprep.subr.mxu0 0.0
  %90 = vmatpush1.msra.mxu0 0.0
  %91 = vmatprep.subr.mxu0 0.0
  %92 = vmatpush1.msra.mxu0 0.0
  %93 = vmatprep.subr.mxu0 0.0
  %94 = vmatpush1.msra.mxu0 0.0
  %95 = vmatprep.subr.mxu0 0.0
  %96 = vmatpush1.msra.mxu0 0.0
  %97 = vmatprep.subr.mxu0 0.0
  %98 = vmatpush1.msra.mxu0 0.0
  %99 = vmatprep.subr.mxu0 0.0
  %100 = vmatpush1.msra.mxu0 0.0
  %101 = vmatprep.subr.mxu0 0.0
  %102 = vmatpush1.msra.mxu0 0.0
  %103 = vmatprep.subr.mxu0 0.0
  %104 = vmatpush1.msra.mxu0 0.0
  %105 = vmatprep.subr.mxu0 0.0
  %106 = vmatpush1.msra.mxu0 0.0
  %107 = vmatprep.subr.mxu0 0.0
  %108 = vmatpush1.msra.mxu0 0.0
  %109 = vmatprep.subr.mxu0 0.0
  %110 = vmatpush1.msra.mxu0 0.0
  %111 = vmatprep.subr.mxu0 0.0
  %112 = vmatpush1.msra.mxu0 0.0
  %113 = vmatprep.mubr.f32.mxu0 0.0
  %114 = vmatmul.mubr.f32.gmra.mrb[0].mxu0 %v47
  %v115 = vpop.f32.mrb[0].mxu0
  %v116 = vadd.f32 0.0, %v115
  %v117 = vpop.f32.mrb[0].mxu0
  %118 = vdwg.mxu0
  %v119 = vxor.u32 %v116, 2147483648
  %v120 = vmul.f32 %v119, 1.442695
  %v121 = vpow.pop %v120
  %v122 = vadd.f32 %v121, 1.0
  %v123 = vrcp.pop %v122
  %v124 = vmul.f32 1.0, %v123
  %v125 = vld [vmem:[%s0] sm:$0x1]
  %v126 = vld [vmem:[%s0 + $0x8] sm:$0x1]
  %v127 = vrot.slane %v44, 1
  %v130 = vsub.f32 %v125, %v44
  %v131 = vsub.f32 %v126, %v127
  %v134 = vrot.slane %v131, 7
  %vm135 = vcmask 1041409
  %v136 = vsel %vm135, %v134, %v130
  %v138 = vmul.f32 %v124, %v136
  %v139 = vadd.f32 %v44, %v138
  %v142 = vunpack.c.l.s4 1966171168
  %v143 = vunpack.c.0.s8 %v142
  %v144 = vlaneseq
  %v145 = vshrl.u32 %v144, 7
  %v146 = vsub.s32 %v143, %v145
  %v147 = vrot.slane %v139, %v146
  %v148 = vcombine.high %v147, %v147
  %v150 = vunpack.c.l.s4 1966171168
  %v151 = vunpack.c.0.s8 %v150
  %v152 = vlaneseq
  %v153 = vshrl.u32 %v152, 7
  %v154 = vsub.s32 %v151, %v153
  %v155 = vrot.slane %v147, %v154
  %v157 = vunpack.c.l.s4 1966171168
  %v158 = vunpack.c.0.s8 %v157
  %v159 = vlaneseq
  %v160 = vshrl.u32 %v159, 7
  %v161 = vsub.s32 %v158, %v160
  %v162 = vrot.slane %v148, %v161
  %vm165 = vcmask 253952
  %166 = vst.msk [vmem:[%s3] sm:$0x1] %vm165, %v155
  %167 = vst.msk [vmem:[%s3 + $0x8] sm:$0x1] %vm165, %v162
  %v168 = vsel %vm45, %v139, 0
  %170 = vmatprep.subr.mxu0 0.0
  %171 = vmatpush1.msra.mxu0 %v40
  %172 = vmatprep.subr.mxu0 0.0
  %173 = vmatpush1.msra.mxu0 %v41
  %174 = vmatprep.subr.mxu0 0.0
  %175 = vmatpush1.msra.mxu0 %v42
  %176 = vmatprep.subr.mxu0 0.0
  %177 = vmatpush1.msra.mxu0 %v43
  %178 = vmatprep.subr.mxu0 0.0
  %179 = vmatpush1.msra.mxu0 0.0
  %180 = vmatprep.subr.mxu0 0.0
  %181 = vmatpush1.msra.mxu0 0.0
  %182 = vmatprep.subr.mxu0 0.0
  %183 = vmatpush1.msra.mxu0 0.0
  %184 = vmatprep.subr.mxu0 0.0
  %185 = vmatpush1.msra.mxu0 0.0
  %186 = vmatprep.subr.mxu0 0.0
  %187 = vmatpush1.msra.mxu0 0.0
  %188 = vmatprep.subr.mxu0 0.0
  %189 = vmatpush1.msra.mxu0 0.0
  %190 = vmatprep.subr.mxu0 0.0
  %191 = vmatpush1.msra.mxu0 0.0
  %192 = vmatprep.subr.mxu0 0.0
  %193 = vmatpush1.msra.mxu0 0.0
  %194 = vmatprep.subr.mxu0 0.0
  %195 = vmatpush1.msra.mxu0 0.0
  %196 = vmatprep.subr.mxu0 0.0
  %197 = vmatpush1.msra.mxu0 0.0
  %198 = vmatprep.subr.mxu0 0.0
  %199 = vmatpush1.msra.mxu0 0.0
  %200 = vmatprep.subr.mxu0 0.0
  %201 = vmatpush1.msra.mxu0 0.0
  %202 = vmatprep.subr.mxu0 0.0
  %203 = vmatpush1.msra.mxu0 0.0
  %204 = vmatprep.subr.mxu0 0.0
  %205 = vmatpush1.msra.mxu0 0.0
  %206 = vmatprep.subr.mxu0 0.0
  %207 = vmatpush1.msra.mxu0 0.0
  %208 = vmatprep.subr.mxu0 0.0
  %209 = vmatpush1.msra.mxu0 0.0
  %210 = vmatprep.subr.mxu0 0.0
  %211 = vmatpush1.msra.mxu0 0.0
  %212 = vmatprep.subr.mxu0 0.0
  %213 = vmatpush1.msra.mxu0 0.0
  %214 = vmatprep.subr.mxu0 0.0
  %215 = vmatpush1.msra.mxu0 0.0
  %216 = vmatprep.subr.mxu0 0.0
  %217 = vmatpush1.msra.mxu0 0.0
  %218 = vmatprep.subr.mxu0 0.0
  %219 = vmatpush1.msra.mxu0 0.0
  %220 = vmatprep.subr.mxu0 0.0
  %221 = vmatpush1.msra.mxu0 0.0
  %222 = vmatprep.subr.mxu0 0.0
  %223 = vmatpush1.msra.mxu0 0.0
  %224 = vmatprep.subr.mxu0 0.0
  %225 = vmatpush1.msra.mxu0 0.0
  %226 = vmatprep.subr.mxu0 0.0
  %227 = vmatpush1.msra.mxu0 0.0
  %228 = vmatprep.subr.mxu0 0.0
  %229 = vmatpush1.msra.mxu0 0.0
  %230 = vmatprep.subr.mxu0 0.0
  %231 = vmatpush1.msra.mxu0 0.0
  %232 = vmatprep.subr.mxu0 0.0
  %233 = vmatpush1.msra.mxu0 0.0
  %234 = vmatprep.mubr.f32.mxu0 0.0
  %235 = vmatmul.mubr.f32.gmra.mrb[0].mxu0 %v168
  %v236 = vpop.f32.mrb[0].mxu0
  %v237 = vadd.f32 0.0, %v236
  %v238 = vpop.f32.mrb[0].mxu0
  %239 = vdwg.mxu0
  %v240 = vxor.u32 %v237, 2147483648
  %v241 = vmul.f32 %v240, 1.442695
  %v242 = vpow.pop %v241
  %v243 = vadd.f32 %v242, 1.0
  %v244 = vrcp.pop %v243
  %v245 = vmul.f32 1.0, %v244
  %v246 = vld [vmem:[%s0 + $0x1] sm:$0x1]
  %v247 = vld [vmem:[%s0 + $0x9] sm:$0x1]
  %v248 = vrot.slane %v139, 1
  %v251 = vsub.f32 %v246, %v139
  %v252 = vsub.f32 %v247, %v248
  %v255 = vrot.slane %v252, 7
  %v256 = vsel %vm135, %v255, %v251
  %v258 = vmul.f32 %v245, %v256
  %v259 = vadd.f32 %v139, %v258
  %v262 = vunpack.c.l.s4 1966171168
  %v263 = vunpack.c.0.s8 %v262
  %v264 = vlaneseq
  %v265 = vshrl.u32 %v264, 7
  %v266 = vsub.s32 %v263, %v265
  %v267 = vrot.slane %v259, %v266
  %v268 = vcombine.high %v267, %v267
  %v270 = vunpack.c.l.s4 1966171168
  %v271 = vunpack.c.0.s8 %v270
  %v272 = vlaneseq
  %v273 = vshrl.u32 %v272, 7
  %v274 = vsub.s32 %v271, %v273
  %v275 = vrot.slane %v267, %v274
  %v277 = vunpack.c.l.s4 1966171168
  %v278 = vunpack.c.0.s8 %v277
  %v279 = vlaneseq
  %v280 = vshrl.u32 %v279, 7
  %v281 = vsub.s32 %v278, %v280
  %v282 = vrot.slane %v268, %v281
  %285 = vst.msk [vmem:[%s3 + $0x1] sm:$0x1] %vm165, %v275
  %286 = vst.msk [vmem:[%s3 + $0x9] sm:$0x1] %vm165, %v282
  %v287 = vsel %vm45, %v259, 0
  %289 = vmatprep.subr.mxu0 0.0
  %290 = vmatpush1.msra.mxu0 %v40
  %291 = vmatprep.subr.mxu0 0.0
  %292 = vmatpush1.msra.mxu0 %v41
  %293 = vmatprep.subr.mxu0 0.0
  %294 = vmatpush1.msra.mxu0 %v42
  %295 = vmatprep.subr.mxu0 0.0
  %296 = vmatpush1.msra.mxu0 %v43
  %297 = vmatprep.subr.mxu0 0.0
  %298 = vmatpush1.msra.mxu0 0.0
  %299 = vmatprep.subr.mxu0 0.0
  %300 = vmatpush1.msra.mxu0 0.0
  %301 = vmatprep.subr.mxu0 0.0
  %302 = vmatpush1.msra.mxu0 0.0
  %303 = vmatprep.subr.mxu0 0.0
  %304 = vmatpush1.msra.mxu0 0.0
  %305 = vmatprep.subr.mxu0 0.0
  %306 = vmatpush1.msra.mxu0 0.0
  %307 = vmatprep.subr.mxu0 0.0
  %308 = vmatpush1.msra.mxu0 0.0
  %309 = vmatprep.subr.mxu0 0.0
  %310 = vmatpush1.msra.mxu0 0.0
  %311 = vmatprep.subr.mxu0 0.0
  %312 = vmatpush1.msra.mxu0 0.0
  %313 = vmatprep.subr.mxu0 0.0
  %314 = vmatpush1.msra.mxu0 0.0
  %315 = vmatprep.subr.mxu0 0.0
  %316 = vmatpush1.msra.mxu0 0.0
  %317 = vmatprep.subr.mxu0 0.0
  %318 = vmatpush1.msra.mxu0 0.0
  %319 = vmatprep.subr.mxu0 0.0
  %320 = vmatpush1.msra.mxu0 0.0
  %321 = vmatprep.subr.mxu0 0.0
  %322 = vmatpush1.msra.mxu0 0.0
  %323 = vmatprep.subr.mxu0 0.0
  %324 = vmatpush1.msra.mxu0 0.0
  %325 = vmatprep.subr.mxu0 0.0
  %326 = vmatpush1.msra.mxu0 0.0
  %327 = vmatprep.subr.mxu0 0.0
  %328 = vmatpush1.msra.mxu0 0.0
  %329 = vmatprep.subr.mxu0 0.0
  %330 = vmatpush1.msra.mxu0 0.0
  %331 = vmatprep.subr.mxu0 0.0
  %332 = vmatpush1.msra.mxu0 0.0
  %333 = vmatprep.subr.mxu0 0.0
  %334 = vmatpush1.msra.mxu0 0.0
  %335 = vmatprep.subr.mxu0 0.0
  %336 = vmatpush1.msra.mxu0 0.0
  %337 = vmatprep.subr.mxu0 0.0
  %338 = vmatpush1.msra.mxu0 0.0
  %339 = vmatprep.subr.mxu0 0.0
  %340 = vmatpush1.msra.mxu0 0.0
  %341 = vmatprep.subr.mxu0 0.0
  %342 = vmatpush1.msra.mxu0 0.0
  %343 = vmatprep.subr.mxu0 0.0
  %344 = vmatpush1.msra.mxu0 0.0
  %345 = vmatprep.subr.mxu0 0.0
  %346 = vmatpush1.msra.mxu0 0.0
  %347 = vmatprep.subr.mxu0 0.0
  %348 = vmatpush1.msra.mxu0 0.0
  %349 = vmatprep.subr.mxu0 0.0
  %350 = vmatpush1.msra.mxu0 0.0
  %351 = vmatprep.subr.mxu0 0.0
  %352 = vmatpush1.msra.mxu0 0.0
  %353 = vmatprep.mubr.f32.mxu0 0.0
  %354 = vmatmul.mubr.f32.gmra.mrb[0].mxu0 %v287
  %v355 = vpop.f32.mrb[0].mxu0
  %v356 = vadd.f32 0.0, %v355
  %v357 = vpop.f32.mrb[0].mxu0
  %358 = vdwg.mxu0
  %v359 = vxor.u32 %v356, 2147483648
  %v360 = vmul.f32 %v359, 1.442695
  %v361 = vpow.pop %v360
  %v362 = vadd.f32 %v361, 1.0
  %v363 = vrcp.pop %v362
  %v364 = vmul.f32 1.0, %v363
  %v365 = vld [vmem:[%s0 + $0x2] sm:$0x1]
  %v366 = vld [vmem:[%s0 + $0xa] sm:$0x1]
  %v367 = vrot.slane %v259, 1
  %v370 = vsub.f32 %v365, %v259
  %v371 = vsub.f32 %v366, %v367
  %v374 = vrot.slane %v371, 7
  %v375 = vsel %vm135, %v374, %v370
  %v377 = vmul.f32 %v364, %v375
  %v378 = vadd.f32 %v259, %v377
  %v381 = vunpack.c.l.s4 1966171168
  %v382 = vunpack.c.0.s8 %v381
  %v383 = vlaneseq
  %v384 = vshrl.u32 %v383, 7
  %v385 = vsub.s32 %v382, %v384
  %v386 = vrot.slane %v378, %v385
  %v387 = vcombine.high %v386, %v386
  %v389 = vunpack.c.l.s4 1966171168
  %v390 = vunpack.c.0.s8 %v389
  %v391 = vlaneseq
  %v392 = vshrl.u32 %v391, 7
  %v393 = vsub.s32 %v390, %v392
  %v394 = vrot.slane %v386, %v393
  %v396 = vunpack.c.l.s4 1966171168
  %v397 = vunpack.c.0.s8 %v396
  %v398 = vlaneseq
  %v399 = vshrl.u32 %v398, 7
  %v400 = vsub.s32 %v397, %v399
  %v401 = vrot.slane %v387, %v400
  %404 = vst.msk [vmem:[%s3 + $0x2] sm:$0x1] %vm165, %v394
  %405 = vst.msk [vmem:[%s3 + $0xa] sm:$0x1] %vm165, %v401
  %v406 = vsel %vm45, %v378, 0
  %408 = vmatprep.subr.mxu0 0.0
  %409 = vmatpush1.msra.mxu0 %v40
  %410 = vmatprep.subr.mxu0 0.0
  %411 = vmatpush1.msra.mxu0 %v41
  %412 = vmatprep.subr.mxu0 0.0
  %413 = vmatpush1.msra.mxu0 %v42
  %414 = vmatprep.subr.mxu0 0.0
  %415 = vmatpush1.msra.mxu0 %v43
  %416 = vmatprep.subr.mxu0 0.0
  %417 = vmatpush1.msra.mxu0 0.0
  %418 = vmatprep.subr.mxu0 0.0
  %419 = vmatpush1.msra.mxu0 0.0
  %420 = vmatprep.subr.mxu0 0.0
  %421 = vmatpush1.msra.mxu0 0.0
  %422 = vmatprep.subr.mxu0 0.0
  %423 = vmatpush1.msra.mxu0 0.0
  %424 = vmatprep.subr.mxu0 0.0
  %425 = vmatpush1.msra.mxu0 0.0
  %426 = vmatprep.subr.mxu0 0.0
  %427 = vmatpush1.msra.mxu0 0.0
  %428 = vmatprep.subr.mxu0 0.0
  %429 = vmatpush1.msra.mxu0 0.0
  %430 = vmatprep.subr.mxu0 0.0
  %431 = vmatpush1.msra.mxu0 0.0
  %432 = vmatprep.subr.mxu0 0.0
  %433 = vmatpush1.msra.mxu0 0.0
  %434 = vmatprep.subr.mxu0 0.0
  %435 = vmatpush1.msra.mxu0 0.0
  %436 = vmatprep.subr.mxu0 0.0
  %437 = vmatpush1.msra.mxu0 0.0
  %438 = vmatprep.subr.mxu0 0.0
  %439 = vmatpush1.msra.mxu0 0.0
  %440 = vmatprep.subr.mxu0 0.0
  %441 = vmatpush1.msra.mxu0 0.0
  %442 = vmatprep.subr.mxu0 0.0
  %443 = vmatpush1.msra.mxu0 0.0
  %444 = vmatprep.subr.mxu0 0.0
  %445 = vmatpush1.msra.mxu0 0.0
  %446 = vmatprep.subr.mxu0 0.0
  %447 = vmatpush1.msra.mxu0 0.0
  %448 = vmatprep.subr.mxu0 0.0
  %449 = vmatpush1.msra.mxu0 0.0
  %450 = vmatprep.subr.mxu0 0.0
  %451 = vmatpush1.msra.mxu0 0.0
  %452 = vmatprep.subr.mxu0 0.0
  %453 = vmatpush1.msra.mxu0 0.0
  %454 = vmatprep.subr.mxu0 0.0
  %455 = vmatpush1.msra.mxu0 0.0
  %456 = vmatprep.subr.mxu0 0.0
  %457 = vmatpush1.msra.mxu0 0.0
  %458 = vmatprep.subr.mxu0 0.0
  %459 = vmatpush1.msra.mxu0 0.0
  %460 = vmatprep.subr.mxu0 0.0
  %461 = vmatpush1.msra.mxu0 0.0
  %462 = vmatprep.subr.mxu0 0.0
  %463 = vmatpush1.msra.mxu0 0.0
  %464 = vmatprep.subr.mxu0 0.0
  %465 = vmatpush1.msra.mxu0 0.0
  %466 = vmatprep.subr.mxu0 0.0
  %467 = vmatpush1.msra.mxu0 0.0
  %468 = vmatprep.subr.mxu0 0.0
  %469 = vmatpush1.msra.mxu0 0.0
  %470 = vmatprep.subr.mxu0 0.0
  %471 = vmatpush1.msra.mxu0 0.0
  %472 = vmatprep.mubr.f32.mxu0 0.0
  %473 = vmatmul.mubr.f32.gmra.mrb[0].mxu0 %v406
  %v474 = vpop.f32.mrb[0].mxu0
  %v475 = vadd.f32 0.0, %v474
  %v476 = vpop.f32.mrb[0].mxu0
  %477 = vdwg.mxu0
  %v478 = vxor.u32 %v475, 2147483648
  %v479 = vmul.f32 %v478, 1.442695
  %v480 = vpow.pop %v479
  %v481 = vadd.f32 %v480, 1.0
  %v482 = vrcp.pop %v481
  %v483 = vmul.f32 1.0, %v482
  %v484 = vld [vmem:[%s0 + $0x3] sm:$0x1]
  %v485 = vld [vmem:[%s0 + $0xb] sm:$0x1]
  %v486 = vrot.slane %v378, 1
  %v489 = vsub.f32 %v484, %v378
  %v490 = vsub.f32 %v485, %v486
  %v493 = vrot.slane %v490, 7
  %v494 = vsel %vm135, %v493, %v489
  %v496 = vmul.f32 %v483, %v494
  %v497 = vadd.f32 %v378, %v496
  %v500 = vunpack.c.l.s4 1966171168
  %v501 = vunpack.c.0.s8 %v500
  %v502 = vlaneseq
  %v503 = vshrl.u32 %v502, 7
  %v504 = vsub.s32 %v501, %v503
  %v505 = vrot.slane %v497, %v504
  %v506 = vcombine.high %v505, %v505
  %v508 = vunpack.c.l.s4 1966171168
  %v509 = vunpack.c.0.s8 %v508
  %v510 = vlaneseq
  %v511 = vshrl.u32 %v510, 7
  %v512 = vsub.s32 %v509, %v511
  %v513 = vrot.slane %v505, %v512
  %v515 = vunpack.c.l.s4 1966171168
  %v516 = vunpack.c.0.s8 %v515
  %v517 = vlaneseq
  %v518 = vshrl.u32 %v517, 7
  %v519 = vsub.s32 %v516, %v518
  %v520 = vrot.slane %v506, %v519
  %523 = vst.msk [vmem:[%s3 + $0x3] sm:$0x1] %vm165, %v513
  %524 = vst.msk [vmem:[%s3 + $0xb] sm:$0x1] %vm165, %v520
  %v525 = vsel %vm45, %v497, 0
  %527 = vmatprep.subr.mxu0 0.0
  %528 = vmatpush1.msra.mxu0 %v40
  %529 = vmatprep.subr.mxu0 0.0
  %530 = vmatpush1.msra.mxu0 %v41
  %531 = vmatprep.subr.mxu0 0.0
  %532 = vmatpush1.msra.mxu0 %v42
  %533 = vmatprep.subr.mxu0 0.0
  %534 = vmatpush1.msra.mxu0 %v43
  %535 = vmatprep.subr.mxu0 0.0
  %536 = vmatpush1.msra.mxu0 0.0
  %537 = vmatprep.subr.mxu0 0.0
  %538 = vmatpush1.msra.mxu0 0.0
  %539 = vmatprep.subr.mxu0 0.0
  %540 = vmatpush1.msra.mxu0 0.0
  %541 = vmatprep.subr.mxu0 0.0
  %542 = vmatpush1.msra.mxu0 0.0
  %543 = vmatprep.subr.mxu0 0.0
  %544 = vmatpush1.msra.mxu0 0.0
  %545 = vmatprep.subr.mxu0 0.0
  %546 = vmatpush1.msra.mxu0 0.0
  %547 = vmatprep.subr.mxu0 0.0
  %548 = vmatpush1.msra.mxu0 0.0
  %549 = vmatprep.subr.mxu0 0.0
  %550 = vmatpush1.msra.mxu0 0.0
  %551 = vmatprep.subr.mxu0 0.0
  %552 = vmatpush1.msra.mxu0 0.0
  %553 = vmatprep.subr.mxu0 0.0
  %554 = vmatpush1.msra.mxu0 0.0
  %555 = vmatprep.subr.mxu0 0.0
  %556 = vmatpush1.msra.mxu0 0.0
  %557 = vmatprep.subr.mxu0 0.0
  %558 = vmatpush1.msra.mxu0 0.0
  %559 = vmatprep.subr.mxu0 0.0
  %560 = vmatpush1.msra.mxu0 0.0
  %561 = vmatprep.subr.mxu0 0.0
  %562 = vmatpush1.msra.mxu0 0.0
  %563 = vmatprep.subr.mxu0 0.0
  %564 = vmatpush1.msra.mxu0 0.0
  %565 = vmatprep.subr.mxu0 0.0
  %566 = vmatpush1.msra.mxu0 0.0
  %567 = vmatprep.subr.mxu0 0.0
  %568 = vmatpush1.msra.mxu0 0.0
  %569 = vmatprep.subr.mxu0 0.0
  %570 = vmatpush1.msra.mxu0 0.0
  %571 = vmatprep.subr.mxu0 0.0
  %572 = vmatpush1.msra.mxu0 0.0
  %573 = vmatprep.subr.mxu0 0.0
  %574 = vmatpush1.msra.mxu0 0.0
  %575 = vmatprep.subr.mxu0 0.0
  %576 = vmatpush1.msra.mxu0 0.0
  %577 = vmatprep.subr.mxu0 0.0
  %578 = vmatpush1.msra.mxu0 0.0
  %579 = vmatprep.subr.mxu0 0.0
  %580 = vmatpush1.msra.mxu0 0.0
  %581 = vmatprep.subr.mxu0 0.0
  %582 = vmatpush1.msra.mxu0 0.0
  %583 = vmatprep.subr.mxu0 0.0
  %584 = vmatpush1.msra.mxu0 0.0
  %585 = vmatprep.subr.mxu0 0.0
  %586 = vmatpush1.msra.mxu0 0.0
  %587 = vmatprep.subr.mxu0 0.0
  %588 = vmatpush1.msra.mxu0 0.0
  %589 = vmatprep.subr.mxu0 0.0
  %590 = vmatpush1.msra.mxu0 0.0
  %591 = vmatprep.mubr.f32.mxu0 0.0
  %592 = vmatmul.mubr.f32.gmra.mrb[0].mxu0 %v525
  %v593 = vpop.f32.mrb[0].mxu0
  %v594 = vadd.f32 0.0, %v593
  %v595 = vpop.f32.mrb[0].mxu0
  %596 = vdwg.mxu0
  %v597 = vxor.u32 %v594, 2147483648
  %v598 = vmul.f32 %v597, 1.442695
  %v599 = vpow.pop %v598
  %v600 = vadd.f32 %v599, 1.0
  %v601 = vrcp.pop %v600
  %v602 = vmul.f32 1.0, %v601
  %v603 = vld [vmem:[%s0 + $0x4] sm:$0x1]
  %v604 = vld [vmem:[%s0 + $0xc] sm:$0x1]
  %v605 = vrot.slane %v497, 1
  %v608 = vsub.f32 %v603, %v497
  %v609 = vsub.f32 %v604, %v605
  %v612 = vrot.slane %v609, 7
  %v613 = vsel %vm135, %v612, %v608
  %v615 = vmul.f32 %v602, %v613
  %v616 = vadd.f32 %v497, %v615
  %v619 = vunpack.c.l.s4 1966171168
  %v620 = vunpack.c.0.s8 %v619
  %v621 = vlaneseq
  %v622 = vshrl.u32 %v621, 7
  %v623 = vsub.s32 %v620, %v622
  %v624 = vrot.slane %v616, %v623
  %v625 = vcombine.high %v624, %v624
  %v627 = vunpack.c.l.s4 1966171168
  %v628 = vunpack.c.0.s8 %v627
  %v629 = vlaneseq
  %v630 = vshrl.u32 %v629, 7
  %v631 = vsub.s32 %v628, %v630
  %v632 = vrot.slane %v624, %v631
  %v634 = vunpack.c.l.s4 1966171168
  %v635 = vunpack.c.0.s8 %v634
  %v636 = vlaneseq
  %v637 = vshrl.u32 %v636, 7
  %v638 = vsub.s32 %v635, %v637
  %v639 = vrot.slane %v625, %v638
  %642 = vst.msk [vmem:[%s3 + $0x4] sm:$0x1] %vm165, %v632
  %643 = vst.msk [vmem:[%s3 + $0xc] sm:$0x1] %vm165, %v639
  %v644 = vsel %vm45, %v616, 0
  %646 = vmatprep.subr.mxu0 0.0
  %647 = vmatpush1.msra.mxu0 %v40
  %648 = vmatprep.subr.mxu0 0.0
  %649 = vmatpush1.msra.mxu0 %v41
  %650 = vmatprep.subr.mxu0 0.0
  %651 = vmatpush1.msra.mxu0 %v42
  %652 = vmatprep.subr.mxu0 0.0
  %653 = vmatpush1.msra.mxu0 %v43
  %654 = vmatprep.subr.mxu0 0.0
  %655 = vmatpush1.msra.mxu0 0.0
  %656 = vmatprep.subr.mxu0 0.0
  %657 = vmatpush1.msra.mxu0 0.0
  %658 = vmatprep.subr.mxu0 0.0
  %659 = vmatpush1.msra.mxu0 0.0
  %660 = vmatprep.subr.mxu0 0.0
  %661 = vmatpush1.msra.mxu0 0.0
  %662 = vmatprep.subr.mxu0 0.0
  %663 = vmatpush1.msra.mxu0 0.0
  %664 = vmatprep.subr.mxu0 0.0
  %665 = vmatpush1.msra.mxu0 0.0
  %666 = vmatprep.subr.mxu0 0.0
  %667 = vmatpush1.msra.mxu0 0.0
  %668 = vmatprep.subr.mxu0 0.0
  %669 = vmatpush1.msra.mxu0 0.0
  %670 = vmatprep.subr.mxu0 0.0
  %671 = vmatpush1.msra.mxu0 0.0
  %672 = vmatprep.subr.mxu0 0.0
  %673 = vmatpush1.msra.mxu0 0.0
  %674 = vmatprep.subr.mxu0 0.0
  %675 = vmatpush1.msra.mxu0 0.0
  %676 = vmatprep.subr.mxu0 0.0
  %677 = vmatpush1.msra.mxu0 0.0
  %678 = vmatprep.subr.mxu0 0.0
  %679 = vmatpush1.msra.mxu0 0.0
  %680 = vmatprep.subr.mxu0 0.0
  %681 = vmatpush1.msra.mxu0 0.0
  %682 = vmatprep.subr.mxu0 0.0
  %683 = vmatpush1.msra.mxu0 0.0
  %684 = vmatprep.subr.mxu0 0.0
  %685 = vmatpush1.msra.mxu0 0.0
  %686 = vmatprep.subr.mxu0 0.0
  %687 = vmatpush1.msra.mxu0 0.0
  %688 = vmatprep.subr.mxu0 0.0
  %689 = vmatpush1.msra.mxu0 0.0
  %690 = vmatprep.subr.mxu0 0.0
  %691 = vmatpush1.msra.mxu0 0.0
  %692 = vmatprep.subr.mxu0 0.0
  %693 = vmatpush1.msra.mxu0 0.0
  %694 = vmatprep.subr.mxu0 0.0
  %695 = vmatpush1.msra.mxu0 0.0
  %696 = vmatprep.subr.mxu0 0.0
  %697 = vmatpush1.msra.mxu0 0.0
  %698 = vmatprep.subr.mxu0 0.0
  %699 = vmatpush1.msra.mxu0 0.0
  %700 = vmatprep.subr.mxu0 0.0
  %701 = vmatpush1.msra.mxu0 0.0
  %702 = vmatprep.subr.mxu0 0.0
  %703 = vmatpush1.msra.mxu0 0.0
  %704 = vmatprep.subr.mxu0 0.0
  %705 = vmatpush1.msra.mxu0 0.0
  %706 = vmatprep.subr.mxu0 0.0
  %707 = vmatpush1.msra.mxu0 0.0
  %708 = vmatprep.subr.mxu0 0.0
  %709 = vmatpush1.msra.mxu0 0.0
  %710 = vmatprep.mubr.f32.mxu0 0.0
  %711 = vmatmul.mubr.f32.gmra.mrb[0].mxu0 %v644
  %v712 = vpop.f32.mrb[0].mxu0
  %v713 = vadd.f32 0.0, %v712
  %v714 = vpop.f32.mrb[0].mxu0
  %715 = vdwg.mxu0
  %v716 = vxor.u32 %v713, 2147483648
  %v717 = vmul.f32 %v716, 1.442695
  %v718 = vpow.pop %v717
  %v719 = vadd.f32 %v718, 1.0
  %v720 = vrcp.pop %v719
  %v721 = vmul.f32 1.0, %v720
  %v722 = vld [vmem:[%s0 + $0x5] sm:$0x1]
  %v723 = vld [vmem:[%s0 + $0xd] sm:$0x1]
  %v724 = vrot.slane %v616, 1
  %v727 = vsub.f32 %v722, %v616
  %v728 = vsub.f32 %v723, %v724
  %v731 = vrot.slane %v728, 7
  %v732 = vsel %vm135, %v731, %v727
  %v734 = vmul.f32 %v721, %v732
  %v735 = vadd.f32 %v616, %v734
  %v738 = vunpack.c.l.s4 1966171168
  %v739 = vunpack.c.0.s8 %v738
  %v740 = vlaneseq
  %v741 = vshrl.u32 %v740, 7
  %v742 = vsub.s32 %v739, %v741
  %v743 = vrot.slane %v735, %v742
  %v744 = vcombine.high %v743, %v743
  %v746 = vunpack.c.l.s4 1966171168
  %v747 = vunpack.c.0.s8 %v746
  %v748 = vlaneseq
  %v749 = vshrl.u32 %v748, 7
  %v750 = vsub.s32 %v747, %v749
  %v751 = vrot.slane %v743, %v750
  %v753 = vunpack.c.l.s4 1966171168
  %v754 = vunpack.c.0.s8 %v753
  %v755 = vlaneseq
  %v756 = vshrl.u32 %v755, 7
  %v757 = vsub.s32 %v754, %v756
  %v758 = vrot.slane %v744, %v757
  %761 = vst.msk [vmem:[%s3 + $0x5] sm:$0x1] %vm165, %v751
  %762 = vst.msk [vmem:[%s3 + $0xd] sm:$0x1] %vm165, %v758
  %v763 = vsel %vm45, %v735, 0
  %765 = vmatprep.subr.mxu0 0.0
  %766 = vmatpush1.msra.mxu0 %v40
  %767 = vmatprep.subr.mxu0 0.0
  %768 = vmatpush1.msra.mxu0 %v41
  %769 = vmatprep.subr.mxu0 0.0
  %770 = vmatpush1.msra.mxu0 %v42
  %771 = vmatprep.subr.mxu0 0.0
  %772 = vmatpush1.msra.mxu0 %v43
  %773 = vmatprep.subr.mxu0 0.0
  %774 = vmatpush1.msra.mxu0 0.0
  %775 = vmatprep.subr.mxu0 0.0
  %776 = vmatpush1.msra.mxu0 0.0
  %777 = vmatprep.subr.mxu0 0.0
  %778 = vmatpush1.msra.mxu0 0.0
  %779 = vmatprep.subr.mxu0 0.0
  %780 = vmatpush1.msra.mxu0 0.0
  %781 = vmatprep.subr.mxu0 0.0
  %782 = vmatpush1.msra.mxu0 0.0
  %783 = vmatprep.subr.mxu0 0.0
  %784 = vmatpush1.msra.mxu0 0.0
  %785 = vmatprep.subr.mxu0 0.0
  %786 = vmatpush1.msra.mxu0 0.0
  %787 = vmatprep.subr.mxu0 0.0
  %788 = vmatpush1.msra.mxu0 0.0
  %789 = vmatprep.subr.mxu0 0.0
  %790 = vmatpush1.msra.mxu0 0.0
  %791 = vmatprep.subr.mxu0 0.0
  %792 = vmatpush1.msra.mxu0 0.0
  %793 = vmatprep.subr.mxu0 0.0
  %794 = vmatpush1.msra.mxu0 0.0
  %795 = vmatprep.subr.mxu0 0.0
  %796 = vmatpush1.msra.mxu0 0.0
  %797 = vmatprep.subr.mxu0 0.0
  %798 = vmatpush1.msra.mxu0 0.0
  %799 = vmatprep.subr.mxu0 0.0
  %800 = vmatpush1.msra.mxu0 0.0
  %801 = vmatprep.subr.mxu0 0.0
  %802 = vmatpush1.msra.mxu0 0.0
  %803 = vmatprep.subr.mxu0 0.0
  %804 = vmatpush1.msra.mxu0 0.0
  %805 = vmatprep.subr.mxu0 0.0
  %806 = vmatpush1.msra.mxu0 0.0
  %807 = vmatprep.subr.mxu0 0.0
  %808 = vmatpush1.msra.mxu0 0.0
  %809 = vmatprep.subr.mxu0 0.0
  %810 = vmatpush1.msra.mxu0 0.0
  %811 = vmatprep.subr.mxu0 0.0
  %812 = vmatpush1.msra.mxu0 0.0
  %813 = vmatprep.subr.mxu0 0.0
  %814 = vmatpush1.msra.mxu0 0.0
  %815 = vmatprep.subr.mxu0 0.0
  %816 = vmatpush1.msra.mxu0 0.0
  %817 = vmatprep.subr.mxu0 0.0
  %818 = vmatpush1.msra.mxu0 0.0
  %819 = vmatprep.subr.mxu0 0.0
  %820 = vmatpush1.msra.mxu0 0.0
  %821 = vmatprep.subr.mxu0 0.0
  %822 = vmatpush1.msra.mxu0 0.0
  %823 = vmatprep.subr.mxu0 0.0
  %824 = vmatpush1.msra.mxu0 0.0
  %825 = vmatprep.subr.mxu0 0.0
  %826 = vmatpush1.msra.mxu0 0.0
  %827 = vmatprep.subr.mxu0 0.0
  %828 = vmatpush1.msra.mxu0 0.0
  %829 = vmatprep.mubr.f32.mxu0 0.0
  %830 = vmatmul.mubr.f32.gmra.mrb[0].mxu0 %v763
  %v831 = vpop.f32.mrb[0].mxu0
  %v832 = vadd.f32 0.0, %v831
  %v833 = vpop.f32.mrb[0].mxu0
  %834 = vdwg.mxu0
  %v835 = vxor.u32 %v832, 2147483648
  %v836 = vmul.f32 %v835, 1.442695
  %v837 = vpow.pop %v836
  %v838 = vadd.f32 %v837, 1.0
  %v839 = vrcp.pop %v838
  %v840 = vmul.f32 1.0, %v839
  %v841 = vld [vmem:[%s0 + $0x6] sm:$0x1]
  %v842 = vld [vmem:[%s0 + $0xe] sm:$0x1]
  %v843 = vrot.slane %v735, 1
  %v846 = vsub.f32 %v841, %v735
  %v847 = vsub.f32 %v842, %v843
  %v850 = vrot.slane %v847, 7
  %v851 = vsel %vm135, %v850, %v846
  %v853 = vmul.f32 %v840, %v851
  %v854 = vadd.f32 %v735, %v853
  %v857 = vunpack.c.l.s4 1966171168
  %v858 = vunpack.c.0.s8 %v857
  %v859 = vlaneseq
  %v860 = vshrl.u32 %v859, 7
  %v861 = vsub.s32 %v858, %v860
  %v862 = vrot.slane %v854, %v861
  %v863 = vcombine.high %v862, %v862
  %v865 = vunpack.c.l.s4 1966171168
  %v866 = vunpack.c.0.s8 %v865
  %v867 = vlaneseq
  %v868 = vshrl.u32 %v867, 7
  %v869 = vsub.s32 %v866, %v868
  %v870 = vrot.slane %v862, %v869
  %v872 = vunpack.c.l.s4 1966171168
  %v873 = vunpack.c.0.s8 %v872
  %v874 = vlaneseq
  %v875 = vshrl.u32 %v874, 7
  %v876 = vsub.s32 %v873, %v875
  %v877 = vrot.slane %v863, %v876
  %880 = vst.msk [vmem:[%s3 + $0x6] sm:$0x1] %vm165, %v870
  %881 = vst.msk [vmem:[%s3 + $0xe] sm:$0x1] %vm165, %v877
  %v882 = vsel %vm45, %v854, 0
  %884 = vmatprep.subr.mxu0 0.0
  %885 = vmatpush1.msra.mxu0 %v40
  %886 = vmatprep.subr.mxu0 0.0
  %887 = vmatpush1.msra.mxu0 %v41
  %888 = vmatprep.subr.mxu0 0.0
  %889 = vmatpush1.msra.mxu0 %v42
  %890 = vmatprep.subr.mxu0 0.0
  %891 = vmatpush1.msra.mxu0 %v43
  %892 = vmatprep.subr.mxu0 0.0
  %893 = vmatpush1.msra.mxu0 0.0
  %894 = vmatprep.subr.mxu0 0.0
  %895 = vmatpush1.msra.mxu0 0.0
  %896 = vmatprep.subr.mxu0 0.0
  %897 = vmatpush1.msra.mxu0 0.0
  %898 = vmatprep.subr.mxu0 0.0
  %899 = vmatpush1.msra.mxu0 0.0
  %900 = vmatprep.subr.mxu0 0.0
  %901 = vmatpush1.msra.mxu0 0.0
  %902 = vmatprep.subr.mxu0 0.0
  %903 = vmatpush1.msra.mxu0 0.0
  %904 = vmatprep.subr.mxu0 0.0
  %905 = vmatpush1.msra.mxu0 0.0
  %906 = vmatprep.subr.mxu0 0.0
  %907 = vmatpush1.msra.mxu0 0.0
  %908 = vmatprep.subr.mxu0 0.0
  %909 = vmatpush1.msra.mxu0 0.0
  %910 = vmatprep.subr.mxu0 0.0
  %911 = vmatpush1.msra.mxu0 0.0
  %912 = vmatprep.subr.mxu0 0.0
  %913 = vmatpush1.msra.mxu0 0.0
  %914 = vmatprep.subr.mxu0 0.0
  %915 = vmatpush1.msra.mxu0 0.0
  %916 = vmatprep.subr.mxu0 0.0
  %917 = vmatpush1.msra.mxu0 0.0
  %918 = vmatprep.subr.mxu0 0.0
  %919 = vmatpush1.msra.mxu0 0.0
  %920 = vmatprep.subr.mxu0 0.0
  %921 = vmatpush1.msra.mxu0 0.0
  %922 = vmatprep.subr.mxu0 0.0
  %923 = vmatpush1.msra.mxu0 0.0
  %924 = vmatprep.subr.mxu0 0.0
  %925 = vmatpush1.msra.mxu0 0.0
  %926 = vmatprep.subr.mxu0 0.0
  %927 = vmatpush1.msra.mxu0 0.0
  %928 = vmatprep.subr.mxu0 0.0
  %929 = vmatpush1.msra.mxu0 0.0
  %930 = vmatprep.subr.mxu0 0.0
  %931 = vmatpush1.msra.mxu0 0.0
  %932 = vmatprep.subr.mxu0 0.0
  %933 = vmatpush1.msra.mxu0 0.0
  %934 = vmatprep.subr.mxu0 0.0
  %935 = vmatpush1.msra.mxu0 0.0
  %936 = vmatprep.subr.mxu0 0.0
  %937 = vmatpush1.msra.mxu0 0.0
  %938 = vmatprep.subr.mxu0 0.0
  %939 = vmatpush1.msra.mxu0 0.0
  %940 = vmatprep.subr.mxu0 0.0
  %941 = vmatpush1.msra.mxu0 0.0
  %942 = vmatprep.subr.mxu0 0.0
  %943 = vmatpush1.msra.mxu0 0.0
  %944 = vmatprep.subr.mxu0 0.0
  %945 = vmatpush1.msra.mxu0 0.0
  %946 = vmatprep.subr.mxu0 0.0
  %947 = vmatpush1.msra.mxu0 0.0
  %948 = vmatprep.mubr.f32.mxu0 0.0
  %949 = vmatmul.mubr.f32.gmra.mrb[0].mxu0 %v882
  %v950 = vpop.f32.mrb[0].mxu0
  %v951 = vadd.f32 0.0, %v950
  %v952 = vpop.f32.mrb[0].mxu0
  %953 = vdwg.mxu0
  %v954 = vxor.u32 %v951, 2147483648
  %v955 = vmul.f32 %v954, 1.442695
  %v956 = vpow.pop %v955
  %v957 = vadd.f32 %v956, 1.0
  %v958 = vrcp.pop %v957
  %v959 = vmul.f32 1.0, %v958
  %v960 = vld [vmem:[%s0 + $0x7] sm:$0x1]
  %v961 = vld [vmem:[%s0 + $0xf] sm:$0x1]
  %v962 = vrot.slane %v854, 1
  %v965 = vsub.f32 %v960, %v854
  %v966 = vsub.f32 %v961, %v962
  %v969 = vrot.slane %v966, 7
  %v970 = vsel %vm135, %v969, %v965
  %v972 = vmul.f32 %v959, %v970
  %v973 = vadd.f32 %v854, %v972
  %v976 = vunpack.c.l.s4 1966171168
  %v977 = vunpack.c.0.s8 %v976
  %v978 = vlaneseq
  %v979 = vshrl.u32 %v978, 7
  %v980 = vsub.s32 %v977, %v979
  %v981 = vrot.slane %v973, %v980
  %v982 = vcombine.high %v981, %v981
  %v984 = vunpack.c.l.s4 1966171168
  %v985 = vunpack.c.0.s8 %v984
  %v986 = vlaneseq
  %v987 = vshrl.u32 %v986, 7
  %v988 = vsub.s32 %v985, %v987
  %v989 = vrot.slane %v981, %v988
  %v991 = vunpack.c.l.s4 1966171168
  %v992 = vunpack.c.0.s8 %v991
  %v993 = vlaneseq
  %v994 = vshrl.u32 %v993, 7
  %v995 = vsub.s32 %v992, %v994
  %v996 = vrot.slane %v982, %v995
  %999 = vst.msk [vmem:[%s3 + $0x7] sm:$0x1] %vm165, %v989
  %1000 = vst.msk [vmem:[%s3 + $0xf] sm:$0x1] %vm165, %v996
  %vm1001 = vcmask 254976
  %1002 = vst.msk [vmem:[#allocation2] sm:$0x3] %vm1001, %v973
  // Predicated region
  $region18: #{mgru_forward.1} parent=0 // pred_check
    _
  $region19: #{mgru_forward.1} parent=0 // pred_check_branch
    %1004 = sbr.rel (0) target = $region21
  $region20: #{mgru_forward.1} parent=0 // pred_region
    _
  $region21: #{mgru_forward.1} parent=0 // pred_fallthru
    _
  // Predicated region
  $region22: #{mgru_forward.1} parent=0 // pred_check
    _
  $region23: #{mgru_forward.1} parent=0 // pred_check_branch
    %1006 = sbr.rel (0) target = $region25
  $region24: #{mgru_forward.1} parent=0 // pred_region
    _
  $region25: #{mgru_forward.1} parent=0 // pred_fallthru
    _

</llo_original>
